<compile_context>
chip_gen: v5e
topology: v5e:2x2
jax: 0.10.0
libtpu: 0.0.40
codegen_flags: <defaults>
</compile_context>

<pallas_src>
import functools

import jax
import jax.numpy as jnp
from jax.experimental import pallas as pl
from jax.experimental.pallas import tpu as pltpu

_VMEM_LIMIT = 48 * 1024 * 1024      # above the 16/32 MiB scoped defaults, safe on v7x
_BLOCK_BYTES = 2 * 1024 * 1024      # ~2 MiB of high-res data per grid step
_MATRIX_BYTES = 8 * 1024 * 1024     # fast path only if membership matrices fit here


def _largest_divisor(n: int, limit: int, prefer_multiple_of: int = 1) -> int:
    """Largest divisor of n that is <= limit, preferring multiples of prefer_multiple_of."""
    limit = max(1, min(n, limit))
    divisors = [d for d in range(1, limit + 1) if n % d == 0]
    preferred = [d for d in divisors if d % prefer_multiple_of == 0]
    return (preferred or divisors)[-1]


# -----------------------------------------------------------------------------
# Fast path: flattened (NC, H*W) layout, pool/upsample as constant-matrix matmuls.
# -----------------------------------------------------------------------------
def _flat_kernel(y_ref, lr_ref, mp_ref, mu_ref, o_ref):
    # y_ref: (Bt, H*W)  lr_ref: (Bt, h*w)  mp_ref: (H*W, h*w)  mu_ref: (h*w, H*W)
    y = y_ref[...].astype(jnp.float32)
    lr = lr_ref[...].astype(jnp.float32)
    pooled = jnp.dot(y, mp_ref[...], preferred_element_type=jnp.float32)   # (Bt, h*w)
    corr = lr / pooled                                                     # (Bt, h*w)
    up = jnp.dot(corr, mu_ref[...], preferred_element_type=jnp.float32)    # (Bt, H*W)
    o_ref[...] = (y * up).astype(o_ref.dtype)


def _mult_downscale_flat(y, lr, k):
    N, C, H, W = y.shape
    h, w = H // k, W // k
    HW, hw = H * W, h * w
    NC = N * C

    y_flat = y.reshape(NC, HW)      # contiguous reshape: free, lane-dense trailing dim
    lr_flat = lr.reshape(NC, hw)

    # Block-membership matrices (constant per shape): pixel p = I*W + J belongs to
    # low-res cell q = (I//k)*w + (J//k).
    p = jnp.arange(HW)
    cell = ((p // W) // k) * w + (p % W) // k                  # (HW,)
    member = cell[:, None] == jnp.arange(hw)[None, :]          # (HW, hw) bool
    m_pool = member.astype(jnp.float32) * (1.0 / (k * k))      # (HW, hw)  avg-pool
    m_up = member.T.astype(jnp.float32)                        # (hw, HW)  kron-upsample

    itemsize = jnp.dtype(y.dtype).itemsize
    bt = _largest_divisor(NC, max(1, _BLOCK_BYTES // (HW * itemsize)),
                          prefer_multiple_of=8)
    grid = (NC // bt,)

    out_flat = pl.pallas_call(
        _flat_kernel,
        out_shape=jax.ShapeDtypeStruct((NC, HW), y.dtype),
        grid_spec=pltpu.PrefetchScalarGridSpec(
            num_scalar_prefetch=0,
            grid=grid,
            in_specs=[
                pl.BlockSpec((bt, HW), lambda i: (i, 0)),
                pl.BlockSpec((bt, hw), lambda i: (i, 0)),
                pl.BlockSpec((HW, hw), lambda i: (0, 0)),   # constant block index ->
                pl.BlockSpec((hw, HW), lambda i: (0, 0)),   # resident across the grid
            ],
            out_specs=pl.BlockSpec((bt, HW), lambda i: (i, 0)),
        ),
        compiler_params=pltpu.CompilerParams(
            dimension_semantics=("parallel",),
            vmem_limit_bytes=_VMEM_LIMIT,
        ),
    )(y_flat, lr_flat, m_pool, m_up)

    return out_flat.reshape(N, C, H, W)


# -----------------------------------------------------------------------------
# Fallback path for large planes: batched (Bt, Ht, W) tiles.
# -----------------------------------------------------------------------------
def _plane_kernel(y_ref, lr_ref, o_ref, *, k):
    # y_ref: (Bt, Ht, W)  lr_ref: (Bt, Ht/k, W/k)
    bt, ht, W = y_ref.shape
    h, w = ht // k, W // k
    y = y_ref[...].astype(jnp.float32)
    lr = lr_ref[...].astype(jnp.float32)
    pooled = y.reshape(bt, h, k, w, k).sum(axis=(2, 4)) * (1.0 / (k * k))
    corr = lr / pooled
    up = jnp.broadcast_to(corr[:, :, None, :, None], (bt, h, k, w, k)).reshape(bt, ht, W)
    o_ref[...] = (y * up).astype(o_ref.dtype)


def _mult_downscale_planes(y, lr, k):
    # TODO(synk): when W % 128 == 0 this path could also use separable constant-matrix
    # matmuls (MXU) instead of the reshape/sum/broadcast chain (XLU relayouts).
    N, C, H, W = y.shape
    h, w = H // k, W // k
    NC = N * C
    itemsize = jnp.dtype(y.dtype).itemsize
    plane_bytes = H * W * itemsize

    if plane_bytes <= _BLOCK_BYTES:
        th = H
        bt = _largest_divisor(NC, max(1, _BLOCK_BYTES // plane_bytes))
    else:
        bt = 1
        th = H
        step = 8 * k                      # keeps lr's sublane tile a multiple of 8
        if H % step == 0:
            th_target = max(step, (_BLOCK_BYTES // (W * itemsize)) // step * step)
            d, best = step, step
            while d <= min(H, th_target):
                if H % d == 0:
                    best = d
                d += step
            th = best

    y_flat = y.reshape(NC, H, W)
    lr_flat = lr.reshape(NC, h, w)
    grid = (NC // bt, H // th)

    out_flat = pl.pallas_call(
        functools.partial(_plane_kernel, k=k),
        out_shape=jax.ShapeDtypeStruct((NC, H, W), y.dtype),
        grid_spec=pltpu.PrefetchScalarGridSpec(
            num_scalar_prefetch=0,
            grid=grid,
            in_specs=[
                pl.BlockSpec((bt, th, W), lambda i, j: (i, j, 0)),
                pl.BlockSpec((bt, th // k, w), lambda i, j: (i, j, 0)),
            ],
            out_specs=pl.BlockSpec((bt, th, W), lambda i, j: (i, j, 0)),
        ),
        compiler_params=pltpu.CompilerParams(
            dimension_semantics=("parallel", "parallel"),
            vmem_limit_bytes=_VMEM_LIMIT,
        ),
    )(y_flat, lr_flat)

    return out_flat.reshape(N, C, H, W)


def mult_downscale_constraints(y, lr, upsampling_factor: int):
    """y: (N, C, H, W) high-res; lr: (N, C, H/k, W/k) low-res.  Returns (N, C, H, W)."""
    k = upsampling_factor
    N, C, H, W = y.shape
    assert H % k == 0 and W % k == 0
    assert lr.shape == (N, C, H // k, W // k)

    matrices_bytes = 2 * (H * W) * (H // k) * (W // k) * 4
    if matrices_bytes <= _MATRIX_BYTES:
        return _mult_downscale_flat(y, lr, k)
    return _mult_downscale_planes(y, lr, k)


def _reference(y, lr, k):
    N, C, H, W = y.shape
    h, w = H // k, W // k
    pooled = y.reshape(N, C, h, k, w, k).mean(axis=(3, 5))
    corr = lr / pooled
    up = jnp.broadcast_to(corr[:, :, :, None, :, None],
                          (N, C, h, k, w, k)).reshape(N, C, H, W)
    return y * up


if __name__ == "__main__":
    key = jax.random.PRNGKey(0)
    k1, k2 = jax.random.split(key)

    N, C, H, W = 2, 4, 16, 16
    upsampling_factor = 4

    # Positive inputs: the multiplicative constraint divides by avgpool(y); the module
    # is used on non-negative physical fields (e.g. precipitation).
    y = jax.random.uniform(k1, (N, C, H, W), dtype=jnp.float32,
                           minval=0.5, maxval=1.5)
    lr = jax.random.uniform(
        k2, (N, C, H // upsampling_factor, W // upsampling_factor),
        dtype=jnp.float32, minval=0.5, maxval=1.5)

    out = mult_downscale_constraints(y, lr, upsampling_factor)
    out = jax.block_until_ready(out)

    ref = _reference(y, lr, upsampling_factor)
    assert out.shape == (N, C, H, W)
    assert jnp.allclose(out, ref, atol=1e-5, rtol=1e-5), "mismatch vs reference"

    print("KERNEL_OK")
</pallas_src>

<mosaic_0001>
module attributes {stable_mosaic.version = 11 : i64} {
  func.func @_flat_kernel(%arg0: i32, %arg1: memref<8x256xf32, #tpu.memory_space<vmem>>, %arg2: memref<8x16xf32, #tpu.memory_space<vmem>>, %arg3: memref<256x16xf32, #tpu.memory_space<vmem>>, %arg4: memref<16x256xf32, #tpu.memory_space<vmem>>, %arg5: memref<8x256xf32, #tpu.memory_space<vmem>>) attributes {dimension_semantics = [#tpu.dimension_semantics<parallel>], iteration_bounds = array<i64: 1>, scalar_prefetch = 0 : i64, scratch_operands = 0 : i64, tpu.core_type = #tpu.core_type<tc>, window_params = [{transform_indices = @transform_0, window_bounds = array<i64: 8, 256>}, {transform_indices = @transform_1, window_bounds = array<i64: 8, 16>}, {pipeline_mode = #tpu.pipeline_mode<synchronous>, transform_indices = @transform_2, window_bounds = array<i64: 256, 16>}, {pipeline_mode = #tpu.pipeline_mode<synchronous>, transform_indices = @transform_3, window_bounds = array<i64: 16, 256>}, {transform_indices = @transform_4, window_bounds = array<i64: 8, 256>}]} {
    %c0 = arith.constant 0 : index
    %c0_0 = arith.constant 0 : index
    %0 = vector.load %arg1[%c0, %c0_0] : memref<8x256xf32, #tpu.memory_space<vmem>>, vector<8x256xf32>
    %c0_1 = arith.constant 0 : index
    %c0_2 = arith.constant 0 : index
    %1 = vector.load %arg2[%c0_1, %c0_2] : memref<8x16xf32, #tpu.memory_space<vmem>>, vector<8x16xf32>
    %c0_3 = arith.constant 0 : index
    %c0_4 = arith.constant 0 : index
    %2 = vector.load %arg3[%c0_3, %c0_4] : memref<256x16xf32, #tpu.memory_space<vmem>>, vector<256x16xf32>
    %cst = arith.constant dense<0.000000e+00> : vector<8x16xf32>
    %3 = tpu.matmul %0, %2, %cst {dimension_numbers = #tpu.dot_dimension_numbers<[1], [0], [0], [1], [0, 0, 1, 1], [], []>} : vector<8x256xf32>, vector<256x16xf32>, vector<8x16xf32> -> vector<8x16xf32>
    %4 = arith.divf %1, %3 : vector<8x16xf32>
    %c0_5 = arith.constant 0 : index
    %c0_6 = arith.constant 0 : index
    %5 = vector.load %arg4[%c0_5, %c0_6] : memref<16x256xf32, #tpu.memory_space<vmem>>, vector<16x256xf32>
    %cst_7 = arith.constant dense<0.000000e+00> : vector<8x256xf32>
    %6 = tpu.matmul %4, %5, %cst_7 {dimension_numbers = #tpu.dot_dimension_numbers<[1], [0], [0], [1], [0, 0, 1, 1], [], []>} : vector<8x16xf32>, vector<16x256xf32>, vector<8x256xf32> -> vector<8x256xf32>
    %7 = arith.mulf %0, %6 : vector<8x256xf32>
    %c0_8 = arith.constant 0 : index
    %c0_9 = arith.constant 0 : index
    %8 = vector.load %arg5[%c0_8, %c0_9] : memref<8x256xf32, #tpu.memory_space<vmem>>, vector<8x256xf32>
    tpu.vector_store %arg5[%c0_8, %c0_9], %7 {strides = array<i32>} : memref<8x256xf32, #tpu.memory_space<vmem>>, vector<8x256xf32>,
    return
  }
  func.func @transform_0(%arg0: i32) -> (i32, i32) {
    %c0_i32 = arith.constant 0 : i32
    %c0_i32_0 = arith.constant 0 : i32
    return %arg0, %c0_i32 : i32, i32
  }
  func.func @transform_1(%arg0: i32) -> (i32, i32) {
    %c0_i32 = arith.constant 0 : i32
    %c0_i32_0 = arith.constant 0 : i32
    return %arg0, %c0_i32 : i32, i32
  }
  func.func @transform_2(%arg0: i32) -> (i32, i32) {
    %c0_i32 = arith.constant 0 : i32
    %c0_i32_0 = arith.constant 0 : i32
    %c0_i32_1 = arith.constant 0 : i32
    return %c0_i32, %c0_i32_0 : i32, i32
  }
  func.func @transform_3(%arg0: i32) -> (i32, i32) {
    %c0_i32 = arith.constant 0 : i32
    %c0_i32_0 = arith.constant 0 : i32
    %c0_i32_1 = arith.constant 0 : i32
    return %c0_i32, %c0_i32_0 : i32, i32
  }
  func.func @transform_4(%arg0: i32) -> (i32, i32) {
    %c0_i32 = arith.constant 0 : i32
    %c0_i32_0 = arith.constant 0 : i32
    return %arg0, %c0_i32 : i32, i32
  }
}

</mosaic_0001>

<llo_original>
// kernel: tpu_custom_call.1
$region0: #{tpu_custom_call.1}
  #allocation0 [shape = 'u32[]', space=smem, size = 0x4, offset = 0x4, fixed_abs, tag = 'smem constant byte address 0x4 - core index']
  #allocation1 [shape = 'u32[72,128]{1,0:T(1,128)}', space=vmem, size = 0x9000, scoped, tag = 'internal scratch']
  %s0 = inlined_call_operand.vmem [shape: f32[8,256], index: 0, kind: input, shape index: {}]
  %s1 = inlined_call_operand.vmem [shape: f32[8,16], index: 1, kind: input, shape index: {}]
  %s2 = inlined_call_operand.vmem [shape: f32[256,16], index: 2, kind: input, shape index: {}]
  %s3 = inlined_call_operand.vmem [shape: f32[16,256], index: 3, kind: input, shape index: {}]
  %s4 = inlined_call_operand.hbm [shape: f32[8,256], index: 4, kind: output, shape index: {}]
  %s5 = sld [smem:[#allocation0]]
  $region26: #{tpu_custom_call.1} parent=0
    _
  %s7 = ssub.s32 1, %s5
  %s8 = scalar_select 0, %s7, %s5
  $region1: #{tpu_custom_call.1} parent=0
    #allocation2 [shape = 'u8[8192]{0}', space=vmem, size = 0x2000, scoped, tag = 'output window, operand 0, single buffered']
    #allocation3 [shape = 's32[1]{0}', space=sflag, size = 0x4, scoped, tag = 'scoped memory for tpu_custom_call.1']
    %9 = vsyncpa [#allocation3], 0
    // Predicated region
    $region2: #{tpu_custom_call.1} parent=1 // pred_check
      _
    $region3: #{tpu_custom_call.1} parent=1 // pred_check_branch
      %11 = sbr.rel (0) target = $region5
    $region4: #{tpu_custom_call.1} parent=1 // pred_region
      _
    $region5: #{tpu_custom_call.1} parent=1 // pred_fallthru
      _
    // Predicated region
    $region6: #{tpu_custom_call.1} parent=1 // pred_check
      _
    $region7: #{tpu_custom_call.1} parent=1 // pred_check_branch
      %13 = sbr.rel (0) target = $region9
    $region8: #{tpu_custom_call.1} parent=1 // pred_region
      _
    $region9: #{tpu_custom_call.1} parent=1 // pred_fallthru
      _
    // Predicated region
    $region10: #{tpu_custom_call.1} parent=1 // pred_check
      _
    $region11: #{tpu_custom_call.1} parent=1 // pred_check_branch
      %15 = sbr.rel (0) target = $region13
    $region12: #{tpu_custom_call.1} parent=1 // pred_region
      _
    $region13: #{tpu_custom_call.1} parent=1 // pred_fallthru
      _
    // Predicated region
    $region14: #{tpu_custom_call.1} parent=1 // pred_check
      _
    $region15: #{tpu_custom_call.1} parent=1 // pred_check_branch
      %17 = sbr.rel (0) target = $region17
    $region16: #{tpu_custom_call.1} parent=1 // pred_region
      _
    $region17: #{tpu_custom_call.1} parent=1 // pred_fallthru
      _
    %v18 = vld [vmem:[%s0] sm:$0xff]
    %v19 = vld [vmem:[%s0 + $0x8] sm:$0xff]
    %v20 = vld [vmem:[%s1] sm:$0xff]
    %v21 = vld [vmem:[%s2] sm:$0xff]
    %v22 = vld [vmem:[%s2 + $0x8] sm:$0xff]
    %v23 = vld [vmem:[%s2 + $0x10] sm:$0xff]
    %v24 = vld [vmem:[%s2 + $0x18] sm:$0xff]
    %v25 = vld [vmem:[%s2 + $0x20] sm:$0xff]
    %v26 = vld [vmem:[%s2 + $0x28] sm:$0xff]
    %v27 = vld [vmem:[%s2 + $0x30] sm:$0xff]
    %v28 = vld [vmem:[%s2 + $0x38] sm:$0xff]
    %v29 = vld [vmem:[%s2 + $0x40] sm:$0xff]
    %v30 = vld [vmem:[%s2 + $0x48] sm:$0xff]
    %v31 = vld [vmem:[%s2 + $0x50] sm:$0xff]
    %v32 = vld [vmem:[%s2 + $0x58] sm:$0xff]
    %v33 = vld [vmem:[%s2 + $0x60] sm:$0xff]
    %v34 = vld [vmem:[%s2 + $0x68] sm:$0xff]
    %v35 = vld [vmem:[%s2 + $0x70] sm:$0xff]
    %v36 = vld [vmem:[%s2 + $0x78] sm:$0xff]
    %v37 = vld [vmem:[%s2 + $0x80] sm:$0xff]
    %v38 = vld [vmem:[%s2 + $0x88] sm:$0xff]
    %v39 = vld [vmem:[%s2 + $0x90] sm:$0xff]
    %v40 = vld [vmem:[%s2 + $0x98] sm:$0xff]
    %v41 = vld [vmem:[%s2 + $0xa0] sm:$0xff]
    %v42 = vld [vmem:[%s2 + $0xa8] sm:$0xff]
    %v43 = vld [vmem:[%s2 + $0xb0] sm:$0xff]
    %v44 = vld [vmem:[%s2 + $0xb8] sm:$0xff]
    %v45 = vld [vmem:[%s2 + $0xc0] sm:$0xff]
    %v46 = vld [vmem:[%s2 + $0xc8] sm:$0xff]
    %v47 = vld [vmem:[%s2 + $0xd0] sm:$0xff]
    %v48 = vld [vmem:[%s2 + $0xd8] sm:$0xff]
    %v49 = vld [vmem:[%s2 + $0xe0] sm:$0xff]
    %v50 = vld [vmem:[%s2 + $0xe8] sm:$0xff]
    %v51 = vld [vmem:[%s2 + $0xf0] sm:$0xff]
    %v52 = vld [vmem:[%s2 + $0xf8] sm:$0xff]
    %53 = vmatpush.msra.mxu0 %v36
    %54 = vmatpush.msra.mxu0 %v35
    %55 = vmatpush.msra.mxu0 %v34
    %56 = vmatpush.msra.mxu0 %v33
    %57 = vmatpush.msra.mxu0 %v32
    %58 = vmatpush.msra.mxu0 %v31
    %59 = vmatpush.msra.mxu0 %v30
    %60 = vmatpush.msra.mxu0 %v29
    %61 = vmatpush.msra.mxu0 %v28
    %62 = vmatpush.msra.mxu0 %v27
    %63 = vmatpush.msra.mxu0 %v26
    %64 = vmatpush.msra.mxu0 %v25
    %65 = vmatpush.msra.mxu0 %v24
    %66 = vmatpush.msra.mxu0 %v23
    %67 = vmatpush.msra.mxu0 %v22
    %68 = vmatpush.msra.mxu0 %v21
    %69 = vmatmul.f32.gmra.mxu0 %v18
    %v70 = vpop.f32.mrf.mxu0
    %v71 = vadd.f32 0.0, %v70
    %72 = vdwg.mxu0
    %73 = vmatpush.msra.mxu0 %v52
    %74 = vmatpush.msra.mxu0 %v51
    %75 = vmatpush.msra.mxu0 %v50
    %76 = vmatpush.msra.mxu0 %v49
    %77 = vmatpush.msra.mxu0 %v48
    %78 = vmatpush.msra.mxu0 %v47
    %79 = vmatpush.msra.mxu0 %v46
    %80 = vmatpush.msra.mxu0 %v45
    %81 = vmatpush.msra.mxu0 %v44
    %82 = vmatpush.msra.mxu0 %v43
    %83 = vmatpush.msra.mxu0 %v42
    %84 = vmatpush.msra.mxu0 %v41
    %85 = vmatpush.msra.mxu0 %v40
    %86 = vmatpush.msra.mxu0 %v39
    %87 = vmatpush.msra.mxu0 %v38
    %88 = vmatpush.msra.mxu0 %v37
    %89 = vmatmul.f32.gmra.mxu0 %v19
    %v90 = vpop.f32.mrf.mxu0
    %v91 = vadd.f32 %v71, %v90
    %92 = vdwg.mxu0
    %v93 = vrcp.pop %v91
    %v94 = vmul.f32 %v91, %v93
    %v95 = vsub.f32 1.0, %v94
    %v96 = vmul.f32 %v93, %v95
    %v97 = vadd.f32 %v93, %v96
    %vm98 = vweird.f32 %v91
    %vm99 = vweird.f32 %v93
    %vm100 = vmor %vm98, %vm99
    %v101 = vsel %vm100, %v93, %v97
    %v102 = vand.u32 2147483647, %v91
    %vm103 = vcmp.eq.f32.partialorder %v102, 8.507059e+37
    %v104 = vand.u32 %v91, 2147483648
    %v105 = vor.u32 1.1754944e-38, %v104
    %v106 = vsel %vm103, %v105, %v101
    %v107 = vmul.f32 %v20, %v106
    %v108 = vld [vmem:[%s3] sm:$0xff]
    %v109 = vld [vmem:[%s3 + $0x8] sm:$0xff]
    %v110 = vld [vmem:[%s3 + $0x10] sm:$0xff]
    %v111 = vld [vmem:[%s3 + $0x18] sm:$0xff]
    %vm112 = vcmask 130048
    %v114 = vsel %vm112, %v107, 0
    %116 = vmatpush.msra.mxu0 0.0
    %117 = vmatpush.msra.mxu0 0.0
    %118 = vmatpush.msra.mxu0 0.0
    %119 = vmatpush.msra.mxu0 0.0
    %120 = vmatpush.msra.mxu0 0.0
    %121 = vmatpush.msra.mxu0 0.0
    %122 = vmatpush.msra.mxu0 0.0
    %123 = vmatpush.msra.mxu0 0.0
    %124 = vmatpush.msra.mxu0 0.0
    %125 = vmatpush.msra.mxu0 0.0
    %126 = vmatpush.msra.mxu0 0.0
    %127 = vmatpush.msra.mxu0 0.0
    %128 = vmatpush.msra.mxu0 0.0
    %129 = vmatpush.msra.mxu0 0.0
    %130 = vmatpush.msra.mxu0 %v110
    %131 = vmatpush.msra.mxu0 %v108
    %132 = vmatmul.f32.gmra.mxu0 %v114
    %v133 = vpop.f32.mrf.mxu0
    %v134 = vadd.f32 0.0, %v133
    %135 = vdwg.mxu0
    %136 = vmatpush.msra.mxu0 0.0
    %137 = vmatpush.msra.mxu0 0.0
    %138 = vmatpush.msra.mxu0 0.0
    %139 = vmatpush.msra.mxu0 0.0
    %140 = vmatpush.msra.mxu0 0.0
    %141 = vmatpush.msra.mxu0 0.0
    %142 = vmatpush.msra.mxu0 0.0
    %143 = vmatpush.msra.mxu0 0.0
    %144 = vmatpush.msra.mxu0 0.0
    %145 = vmatpush.msra.mxu0 0.0
    %146 = vmatpush.msra.mxu0 0.0
    %147 = vmatpush.msra.mxu0 0.0
    %148 = vmatpush.msra.mxu0 0.0
    %149 = vmatpush.msra.mxu0 0.0
    %150 = vmatpush.msra.mxu0 %v111
    %151 = vmatpush.msra.mxu0 %v109
    %152 = vmatmul.f32.gmra.mxu0 %v114
    %v153 = vpop.f32.mrf.mxu0
    %v154 = vadd.f32 0.0, %v153
    %155 = vdwg.mxu0
    %v156 = vmul.f32 %v18, %v134
    %v157 = vmul.f32 %v19, %v154
    %158 = vst [vmem:[#allocation2] sm:$0xff] %v156
    %159 = vst [vmem:[#allocation2 + $0x8] sm:$0xff] %v157
    // Predicated region
    $region18: #{tpu_custom_call.1} parent=1 // pred_check
      _
    $region19: #{tpu_custom_call.1} parent=1 // pred_check_branch
      %161 = sbr.rel (0) target = $region21
    $region20: #{tpu_custom_call.1} parent=1 // pred_region
      %163 = vsyncadd [#allocation3], 0
      %s165 = sshll.u32 [#allocation2], 4
      %s166 = int_to_ptr.vmem [resolvable:$true] %s165
      %s167 = sshll.u32 %s4, 4
      %s168 = int_to_ptr.hbm [resolvable:$true] %s167
      %170 = dma.vmem_to_hbm [thread:$0]  %s166, 256, %s168, [#allocation3]
    $region21: #{tpu_custom_call.1} parent=1 // pred_fallthru
      _
    // Predicated region
    $region22: #{tpu_custom_call.1} parent=1 // pred_check
      _
    $region23: #{tpu_custom_call.1} parent=1 // pred_check_branch
      %172 = sbr.rel (0) target = $region25
    $region24: #{tpu_custom_call.1} parent=1 // pred_region
      %174 = dma.done [#allocation3], 256
    $region25: #{tpu_custom_call.1} parent=1 // pred_fallthru
      _
    %175 = vsyncpa [#allocation3], 1

</llo_original>
